<compile_context>
chip_gen: v6e
topology: v6e:2x2x1
jax: 0.10.0
libtpu: 0.0.40
codegen_flags: <defaults>
</compile_context>

<pallas_src>
import jax
import jax.numpy as jnp
from jax.experimental import pallas as pl
from jax.experimental.pallas import tpu as pltpu

LANES = 128
_SINGLE_BLOCK_MAX_BYTES = 1 << 20      # gridless path below ~1 MiB of sub+out traffic
_VMEM_BUDGET_BYTES = 12 << 20          # per-copy working-set budget (x2 double-buffer)


# ----------------------------- kernels --------------------------------------


def _bayes_folded_kernel(parent_ref, sub_ref, seg_ref, bcast_ref, out_ref):
    # parent_ref: (TB, R)    -- R parent probs per folded row (dense layout)
    # sub_ref   : (TB, 128)  -- R segments of C subclass probs per folded row
    # seg_ref   : (128, 128) -- kron(eye(R), ones((C, C))): segmented sum + broadcast
    # bcast_ref : (R, 128)   -- kron(eye(R), ones((1, C))): parent broadcast
    # out_ref   : (TB, 128)
    sub = sub_ref[...].astype(jnp.float32)
    # Segmented row sums, broadcast back to every lane of the segment (MXU).
    denom = jnp.dot(sub, seg_ref[...], preferred_element_type=jnp.float32)
    parent = jnp.dot(parent_ref[...].astype(jnp.float32), bcast_ref[...],
                     preferred_element_type=jnp.float32)
    # Exact division to match torch (kernel is HBM-bound; no approx reciprocal).
    out_ref[...] = (parent * sub / denom).astype(out_ref.dtype)


def _bayes_rowwise_kernel(parent_ref, sub_ref, out_ref):
    # Fallback layout (C does not divide 128): parent (TB, 1), sub/out (TB, C).
    sub = sub_ref[...].astype(jnp.float32)
    parent = parent_ref[...].astype(jnp.float32)
    denom = jnp.sum(sub, axis=1, keepdims=True)
    out_ref[...] = (parent * sub / denom).astype(out_ref.dtype)


# --------------------------- tile selection ----------------------------------


def _pick_tile(rows, bytes_per_row_hbm, bytes_per_row_vmem, target_tile_bytes):
    tb = max(1, target_tile_bytes // max(1, bytes_per_row_hbm))      # ~2-4 MiB / step
    tb = min(tb, _VMEM_BUDGET_BYTES // (2 * max(1, bytes_per_row_vmem)))  # dbl-buffer fit
    tb = min(tb, pl.cdiv(rows, 4))                                   # keep >= ~4 steps
    return max(8, (tb // 8) * 8)


# ----------------------------- wrappers --------------------------------------


def _folded_path(parent_prob, subclass_probs, target_tile_bytes):
    B, C = subclass_probs.shape
    dtype = subclass_probs.dtype
    itemsize = jnp.dtype(dtype).itemsize
    R = LANES // C

    # Pad batch so the folded row count is a multiple of 8 (sublane tiling).
    fold_unit = R * 8
    B_pad = ((B + fold_unit - 1) // fold_unit) * fold_unit
    if B_pad != B:
        # Pad subclass probs with ones so padded rows have a nonzero denominator.
        subclass_probs = jnp.pad(
            subclass_probs, ((0, B_pad - B), (0, 0)), constant_values=1)
        parent_prob = jnp.pad(parent_prob, ((0, B_pad - B), (0, 0)))

    Bf = B_pad // R
    sub_f = subclass_probs.reshape(Bf, LANES)   # lane-dense, free row-major view
    parent_f = parent_prob.reshape(Bf, R)       # dense parent layout (no (tb,1) blowup)

    # Constant matrices for the in-kernel segmented reduction / broadcast.
    seg = jnp.kron(jnp.eye(R, dtype=jnp.float32), jnp.ones((C, C), jnp.float32))
    bcast = jnp.kron(jnp.eye(R, dtype=jnp.float32), jnp.ones((1, C), jnp.float32))

    total_io_bytes = 2 * Bf * LANES * itemsize

    if total_io_bytes <= _SINGLE_BLOCK_MAX_BYTES:
        out_f = pl.pallas_call(
            _bayes_folded_kernel,
            out_shape=jax.ShapeDtypeStruct((Bf, LANES), dtype),
            in_specs=[pl.BlockSpec(memory_space=pltpu.MemorySpace.VMEM)] * 4,
            out_specs=pl.BlockSpec(memory_space=pltpu.MemorySpace.VMEM),
        )(parent_f, sub_f, seg, bcast)
    else:
        # VMEM per folded row: sub + out + lane-padded parent block.
        bytes_per_row_vmem = (2 * LANES + LANES) * itemsize
        tb = _pick_tile(Bf, LANES * itemsize, bytes_per_row_vmem, target_tile_bytes)
        grid = (pl.cdiv(Bf, tb),)
        out_f = pl.pallas_call(
            _bayes_folded_kernel,
            out_shape=jax.ShapeDtypeStruct((Bf, LANES), dtype),
            grid=grid,
            in_specs=[
                pl.BlockSpec((tb, R), lambda i: (i, 0)),
                pl.BlockSpec((tb, LANES), lambda i: (i, 0)),
                pl.BlockSpec((LANES, LANES), lambda i: (0, 0)),   # fetched once
                pl.BlockSpec((R, LANES), lambda i: (0, 0)),       # fetched once
            ],
            out_specs=pl.BlockSpec((tb, LANES), lambda i: (i, 0)),
            compiler_params=pltpu.CompilerParams(
                dimension_semantics=("parallel",)),
            cost_estimate=pl.CostEstimate(
                flops=3 * B_pad * C,
                transcendentals=0,
                bytes_accessed=2 * B_pad * C * itemsize + B_pad * itemsize),
        )(parent_f, sub_f, seg, bcast)

    out = out_f.reshape(B_pad, C)
    if B_pad != B:
        out = out[:B]
    return out


def _rowwise_path(parent_prob, subclass_probs, target_tile_bytes):
    B, C = subclass_probs.shape
    dtype = subclass_probs.dtype
    itemsize = jnp.dtype(dtype).itemsize
    total_io_bytes = 2 * B * C * itemsize

    if total_io_bytes <= _SINGLE_BLOCK_MAX_BYTES:
        return pl.pallas_call(
            _bayes_rowwise_kernel,
            out_shape=jax.ShapeDtypeStruct((B, C), dtype),
            in_specs=[pl.BlockSpec(memory_space=pltpu.MemorySpace.VMEM)] * 2,
            out_specs=pl.BlockSpec(memory_space=pltpu.MemorySpace.VMEM),
        )(parent_prob, subclass_probs)

    padded_c = ((C + LANES - 1) // LANES) * LANES
    bytes_per_row_vmem = (2 * padded_c + LANES) * itemsize   # sub + out + padded parent
    tb = _pick_tile(B, C * itemsize, bytes_per_row_vmem, target_tile_bytes)
    grid = (pl.cdiv(B, tb),)
    return pl.pallas_call(
        _bayes_rowwise_kernel,
        out_shape=jax.ShapeDtypeStruct((B, C), dtype),
        grid=grid,
        in_specs=[
            pl.BlockSpec((tb, 1), lambda i: (i, 0)),
            pl.BlockSpec((tb, C), lambda i: (i, 0)),
        ],
        out_specs=pl.BlockSpec((tb, C), lambda i: (i, 0)),
        compiler_params=pltpu.CompilerParams(dimension_semantics=("parallel",)),
        cost_estimate=pl.CostEstimate(
            flops=3 * B * C,
            transcendentals=0,
            bytes_accessed=2 * B * C * itemsize + B * itemsize),
    )(parent_prob, subclass_probs)


def custom_bayes_layer(parent_prob, subclass_probs, *, target_tile_bytes=4 << 20):
    """parent_prob: (B, 1), subclass_probs: (B, C) -> (B, C).

    out = parent_prob * subclass_probs / sum(subclass_probs, axis=1, keepdims=True)
    Rows whose subclass sum is ~0 produce inf/nan, matching the torch module.
    """
    B, C = subclass_probs.shape
    assert parent_prob.shape == (B, 1), "parent_prob must be (B, 1)"
    if C <= LANES and LANES % C == 0:
        return _folded_path(parent_prob, subclass_probs, target_tile_bytes)
    return _rowwise_path(parent_prob, subclass_probs, target_tile_bytes)


# ------------------------------- test ----------------------------------------


if __name__ == "__main__":
    key = jax.random.PRNGKey(0)
    ks = jax.random.split(key, 8)

    def ref_fn(p, s):
        return p * s / jnp.sum(s, axis=1, keepdims=True)

    # 1) Tiny folded (gridless) path: batch=8, subclasses=16.
    B, C = 8, 16
    p1 = jax.nn.sigmoid(jax.random.normal(ks[0], (B, 1), jnp.float32))
    s1 = jax.nn.softmax(jax.random.normal(ks[1], (B, C), jnp.float32), axis=-1)
    o1 = jax.block_until_ready(custom_bayes_layer(p1, s1))
    assert o1.shape == (B, C)
    assert jnp.allclose(o1, ref_fn(p1, s1), atol=1e-6, rtol=1e-5), "mismatch (tiny)"

    # 2) Batch not a multiple of the fold unit -> wrapper padding path.
    B2 = 13
    p2 = jax.nn.sigmoid(jax.random.normal(ks[2], (B2, 1), jnp.float32))
    s2 = jax.nn.softmax(jax.random.normal(ks[3], (B2, C), jnp.float32), axis=-1)
    o2 = jax.block_until_ready(custom_bayes_layer(p2, s2))
    assert o2.shape == (B2, C)
    assert jnp.allclose(o2, ref_fn(p2, s2), atol=1e-6, rtol=1e-5), "mismatch (padded)"

    # 3) Larger batch -> lane-dense tiled streaming path (>= 4 grid steps).
    B3 = 16384
    p3 = jax.nn.sigmoid(jax.random.normal(ks[4], (B3, 1), jnp.float32))
    s3 = jax.nn.softmax(jax.random.normal(ks[5], (B3, C), jnp.float32), axis=-1)
    o3 = jax.block_until_ready(
        custom_bayes_layer(p3, s3, target_tile_bytes=1 << 18))
    assert o3.shape == (B3, C)
    assert jnp.allclose(o3, ref_fn(p3, s3), atol=1e-6, rtol=1e-5), "mismatch (tiled)"

    # 4) Class count that does not divide 128 -> row-wise fallback kernel.
    B4, C4 = 64, 10
    p4 = jax.nn.sigmoid(jax.random.normal(ks[6], (B4, 1), jnp.float32))
    s4 = jax.nn.softmax(jax.random.normal(ks[7], (B4, C4), jnp.float32), axis=-1)
    o4 = jax.block_until_ready(custom_bayes_layer(p4, s4))
    assert o4.shape == (B4, C4)
    assert jnp.allclose(o4, ref_fn(p4, s4), atol=1e-6, rtol=1e-5), "mismatch (fallback)"

    print("KERNEL_OK")
</pallas_src>

<mosaic_0001>
module attributes {stable_mosaic.version = 11 : i64} {
  func.func @_bayes_folded_kernel(%arg0: memref<8x8xf32, #tpu.memory_space<vmem>>, %arg1: memref<8x128xf32, #tpu.memory_space<vmem>>, %arg2: memref<128x128xf32, #tpu.memory_space<vmem>>, %arg3: memref<8x128xf32, #tpu.memory_space<vmem>>, %arg4: memref<8x128xf32, #tpu.memory_space<vmem>>) attributes {dimension_semantics = [], scalar_prefetch = 0 : i64, scratch_operands = 0 : i64, tpu.core_type = #tpu.core_type<tc>} {
    %c0 = arith.constant 0 : index
    %c0_0 = arith.constant 0 : index
    %0 = vector.load %arg1[%c0, %c0_0] : memref<8x128xf32, #tpu.memory_space<vmem>>, vector<8x128xf32>
    %c0_1 = arith.constant 0 : index
    %c0_2 = arith.constant 0 : index
    %1 = vector.load %arg2[%c0_1, %c0_2] : memref<128x128xf32, #tpu.memory_space<vmem>>, vector<128x128xf32>
    %cst = arith.constant dense<0.000000e+00> : vector<8x128xf32>
    %2 = tpu.matmul %0, %1, %cst {dimension_numbers = #tpu.dot_dimension_numbers<[1], [0], [0], [1], [0, 0, 1, 1], [], []>} : vector<8x128xf32>, vector<128x128xf32>, vector<8x128xf32> -> vector<8x128xf32>
    %c0_3 = arith.constant 0 : index
    %c0_4 = arith.constant 0 : index
    %3 = vector.load %arg0[%c0_3, %c0_4] : memref<8x8xf32, #tpu.memory_space<vmem>>, vector<8x8xf32>
    %c0_5 = arith.constant 0 : index
    %c0_6 = arith.constant 0 : index
    %4 = vector.load %arg3[%c0_5, %c0_6] : memref<8x128xf32, #tpu.memory_space<vmem>>, vector<8x128xf32>
    %cst_7 = arith.constant dense<0.000000e+00> : vector<8x128xf32>
    %5 = tpu.matmul %3, %4, %cst_7 {dimension_numbers = #tpu.dot_dimension_numbers<[1], [0], [0], [1], [0, 0, 1, 1], [], []>} : vector<8x8xf32>, vector<8x128xf32>, vector<8x128xf32> -> vector<8x128xf32>
    %6 = arith.mulf %5, %0 : vector<8x128xf32>
    %7 = arith.divf %6, %2 : vector<8x128xf32>
    %c0_8 = arith.constant 0 : index
    %c0_9 = arith.constant 0 : index
    %8 = vector.load %arg4[%c0_8, %c0_9] : memref<8x128xf32, #tpu.memory_space<vmem>>, vector<8x128xf32>
    tpu.vector_store %arg4[%c0_8, %c0_9], %7 {strides = array<i32>} : memref<8x128xf32, #tpu.memory_space<vmem>>, vector<8x128xf32>,
    return
  }
}

</mosaic_0001>

<llo_original>
// kernel: tpu_custom_call.1
$region0: #{tpu_custom_call.1}
  #allocation0 [shape = 'u32[]', space=smem, size = 0x4, offset = 0x4, fixed_abs, tag = 'smem constant byte address 0x4 - core index']
  #allocation1 [shape = 'u32[144,128]{1,0:T(1,128)}', space=vmem, size = 0x12000, scoped, tag = 'internal scratch']
  %s0 = inlined_call_operand.hbm [shape: f32[8,8], index: 0, kind: input, shape index: {}]
  %s1 = inlined_call_operand.hbm [shape: f32[8,128], index: 1, kind: input, shape index: {}]
  %s2 = inlined_call_operand.hbm [shape: f32[128,128], index: 2, kind: input, shape index: {}]
  %s3 = inlined_call_operand.hbm [shape: f32[8,128], index: 3, kind: input, shape index: {}]
  %s4 = inlined_call_operand.hbm [shape: f32[8,128], index: 4, kind: output, shape index: {}]
  %s5 = sld [smem:[#allocation0]]
  $region42: #{tpu_custom_call.1} parent=0
    _
  %s7 = ssub.s32 1, %s5
  %s8 = scalar_select 0, %s7, %s5
  $region1: #{tpu_custom_call.1} parent=0
    #allocation2 [shape = 'u8[4096]{0}', space=vmem, size = 0x1000, scoped, tag = 'input window, operand 0, single buffered']
    #allocation3 [shape = 's32[1]{0}', space=sflag, size = 0x4, scoped, tag = 'scoped memory for tpu_custom_call.1']
    #allocation4 [shape = 's32[1]{0}', space=sflag, size = 0x4, scoped, tag = 'scoped memory for tpu_custom_call.1']
    #allocation5 [shape = 'u8[4096]{0}', space=vmem, size = 0x1000, scoped, tag = 'input window, operand 1, single buffered']
    #allocation6 [shape = 's32[1]{0}', space=sflag, size = 0x4, scoped, tag = 'scoped memory for tpu_custom_call.1']
    #allocation7 [shape = 'u8[65536]{0}', space=vmem, size = 0x10000, scoped, tag = 'input window, operand 2, single buffered']
    #allocation8 [shape = 'u8[4096]{0}', space=vmem, size = 0x1000, scoped, tag = 'input window, operand 3, single buffered']
    #allocation9 [shape = 's32[1]{0}', space=sflag, size = 0x4, scoped, tag = 'scoped memory for tpu_custom_call.1']
    #allocation10 [shape = 'u8[4096]{0}', space=vmem, size = 0x1000, scoped, tag = 'output window, operand 0, single buffered']
    %9 = vsyncpa [#allocation3], 0
    %10 = vsyncpa [#allocation6], 0
    %11 = vsyncpa [#allocation9], 0
    %12 = vsyncpa [#allocation4], 0
    // Predicated region
    $region2: #{tpu_custom_call.1} parent=1 // pred_check
      _
    $region3: #{tpu_custom_call.1} parent=1 // pred_check_branch
      %14 = sbr.rel (0) target = $region5
    $region4: #{tpu_custom_call.1} parent=1 // pred_region
      %s16 = ssub.s32 128, 128
      %17 = vsyncadd [#allocation3], %s16
      %s19 = sshll.u32 [#allocation2], 4
      %s20 = int_to_ptr.vmem [resolvable:$true] %s19
      %22 = dma.hbm_to_vmem [thread:$0]  %s0, 128, %s20, [#allocation3]
    $region5: #{tpu_custom_call.1} parent=1 // pred_fallthru
      _
    // Predicated region
    $region6: #{tpu_custom_call.1} parent=1 // pred_check
      _
    $region7: #{tpu_custom_call.1} parent=1 // pred_check_branch
      %24 = sbr.rel (0) target = $region9
    $region8: #{tpu_custom_call.1} parent=1 // pred_region
      %s26 = ssub.s32 128, 128
      %27 = vsyncadd [#allocation6], %s26
      %s29 = sshll.u32 [#allocation5], 4
      %s30 = int_to_ptr.vmem [resolvable:$true] %s29
      %32 = dma.hbm_to_vmem [thread:$0]  %s1, 128, %s30, [#allocation6]
    $region9: #{tpu_custom_call.1} parent=1 // pred_fallthru
      _
    // Predicated region
    $region10: #{tpu_custom_call.1} parent=1 // pred_check
      _
    $region11: #{tpu_custom_call.1} parent=1 // pred_check_branch
      %34 = sbr.rel (0) target = $region13
    $region12: #{tpu_custom_call.1} parent=1 // pred_region
      %s36 = ssub.s32 2048, 2048
      %37 = vsyncadd [#allocation6], %s36
      %s38 = sshll.u32 [#allocation7], 4
      %s39 = int_to_ptr.vmem [resolvable:$true] %s38
      %44 = dma.hbm_to_vmem [thread:$0]  %s2, 2048, %s39, [#allocation6], 128, 128, 8
    $region13: #{tpu_custom_call.1} parent=1 // pred_fallthru
      _
    // Predicated region
    $region14: #{tpu_custom_call.1} parent=1 // pred_check
      _
    $region15: #{tpu_custom_call.1} parent=1 // pred_check_branch
      %46 = sbr.rel (0) target = $region17
    $region16: #{tpu_custom_call.1} parent=1 // pred_region
      %s48 = ssub.s32 128, 128
      %49 = vsyncadd [#allocation9], %s48
      %s51 = sshll.u32 [#allocation8], 4
      %s52 = int_to_ptr.vmem [resolvable:$true] %s51
      %54 = dma.hbm_to_vmem [thread:$0]  %s3, 128, %s52, [#allocation9]
    $region17: #{tpu_custom_call.1} parent=1 // pred_fallthru
      _
    // Predicated region
    $region18: #{tpu_custom_call.1} parent=1 // pred_check
      _
    $region19: #{tpu_custom_call.1} parent=1 // pred_check_branch
      %56 = sbr.rel (0) target = $region21
    $region20: #{tpu_custom_call.1} parent=1 // pred_region
      %57 = dma.done [#allocation3], 128
    $region21: #{tpu_custom_call.1} parent=1 // pred_fallthru
      _
    // Predicated region
    $region22: #{tpu_custom_call.1} parent=1 // pred_check
      _
    $region23: #{tpu_custom_call.1} parent=1 // pred_check_branch
      %59 = sbr.rel (0) target = $region25
    $region24: #{tpu_custom_call.1} parent=1 // pred_region
      %60 = dma.done [#allocation6], 128
    $region25: #{tpu_custom_call.1} parent=1 // pred_fallthru
      _
    // Predicated region
    $region26: #{tpu_custom_call.1} parent=1 // pred_check
      _
    $region27: #{tpu_custom_call.1} parent=1 // pred_check_branch
      %62 = sbr.rel (0) target = $region29
    $region28: #{tpu_custom_call.1} parent=1 // pred_region
      %63 = dma.done [#allocation6], 2048
    $region29: #{tpu_custom_call.1} parent=1 // pred_fallthru
      _
    // Predicated region
    $region30: #{tpu_custom_call.1} parent=1 // pred_check
      _
    $region31: #{tpu_custom_call.1} parent=1 // pred_check_branch
      %65 = sbr.rel (0) target = $region33
    $region32: #{tpu_custom_call.1} parent=1 // pred_region
      %66 = dma.done [#allocation9], 128
    $region33: #{tpu_custom_call.1} parent=1 // pred_fallthru
      _
    %v67 = vld [vmem:[#allocation5] sm:$0xff]
    %v68 = vld [vmem:[#allocation7] sm:$0xff]
    %v69 = vld [vmem:[#allocation7 + $0x8] sm:$0xff]
    %v70 = vld [vmem:[#allocation7 + $0x10] sm:$0xff]
    %v71 = vld [vmem:[#allocation7 + $0x18] sm:$0xff]
    %v72 = vld [vmem:[#allocation7 + $0x20] sm:$0xff]
    %v73 = vld [vmem:[#allocation7 + $0x28] sm:$0xff]
    %v74 = vld [vmem:[#allocation7 + $0x30] sm:$0xff]
    %v75 = vld [vmem:[#allocation7 + $0x38] sm:$0xff]
    %v76 = vld [vmem:[#allocation7 + $0x40] sm:$0xff]
    %v77 = vld [vmem:[#allocation7 + $0x48] sm:$0xff]
    %v78 = vld [vmem:[#allocation7 + $0x50] sm:$0xff]
    %v79 = vld [vmem:[#allocation7 + $0x58] sm:$0xff]
    %v80 = vld [vmem:[#allocation7 + $0x60] sm:$0xff]
    %v81 = vld [vmem:[#allocation7 + $0x68] sm:$0xff]
    %v82 = vld [vmem:[#allocation7 + $0x70] sm:$0xff]
    %v83 = vld [vmem:[#allocation7 + $0x78] sm:$0xff]
    %84 = vmatprep.subr.mxu0 0.0
    %85 = vmatpush1.msra.mxu0 %v83
    %86 = vmatprep.subr.mxu0 0.0
    %87 = vmatpush1.msra.mxu0 %v82
    %88 = vmatprep.subr.mxu0 0.0
    %89 = vmatpush1.msra.mxu0 %v81
    %90 = vmatprep.subr.mxu0 0.0
    %91 = vmatpush1.msra.mxu0 %v80
    %92 = vmatprep.subr.mxu0 0.0
    %93 = vmatpush1.msra.mxu0 %v79
    %94 = vmatprep.subr.mxu0 0.0
    %95 = vmatpush1.msra.mxu0 %v78
    %96 = vmatprep.subr.mxu0 0.0
    %97 = vmatpush1.msra.mxu0 %v77
    %98 = vmatprep.subr.mxu0 0.0
    %99 = vmatpush1.msra.mxu0 %v76
    %100 = vmatprep.subr.mxu0 0.0
    %101 = vmatpush1.msra.mxu0 %v75
    %102 = vmatprep.subr.mxu0 0.0
    %103 = vmatpush1.msra.mxu0 %v74
    %104 = vmatprep.subr.mxu0 0.0
    %105 = vmatpush1.msra.mxu0 %v73
    %106 = vmatprep.subr.mxu0 0.0
    %107 = vmatpush1.msra.mxu0 %v72
    %108 = vmatprep.subr.mxu0 0.0
    %109 = vmatpush1.msra.mxu0 %v71
    %110 = vmatprep.subr.mxu0 0.0
    %111 = vmatpush1.msra.mxu0 %v70
    %112 = vmatprep.subr.mxu0 0.0
    %113 = vmatpush1.msra.mxu0 %v69
    %114 = vmatprep.subr.mxu0 0.0
    %115 = vmatpush1.msra.mxu0 %v68
    %116 = vmatprep.subr.mxu0 0.0
    %117 = vmatpush2.msra.mxu0 0.0
    %118 = vmatprep.subr.mxu0 0.0
    %119 = vmatpush2.msra.mxu0 0.0
    %120 = vmatprep.subr.mxu0 0.0
    %121 = vmatpush2.msra.mxu0 0.0
    %122 = vmatprep.subr.mxu0 0.0
    %123 = vmatpush2.msra.mxu0 0.0
    %124 = vmatprep.subr.mxu0 0.0
    %125 = vmatpush2.msra.mxu0 0.0
    %126 = vmatprep.subr.mxu0 0.0
    %127 = vmatpush2.msra.mxu0 0.0
    %128 = vmatprep.subr.mxu0 0.0
    %129 = vmatpush2.msra.mxu0 0.0
    %130 = vmatprep.subr.mxu0 0.0
    %131 = vmatpush2.msra.mxu0 0.0
    %132 = vmatprep.subr.mxu0 0.0
    %133 = vmatpush2.msra.mxu0 0.0
    %134 = vmatprep.subr.mxu0 0.0
    %135 = vmatpush2.msra.mxu0 0.0
    %136 = vmatprep.subr.mxu0 0.0
    %137 = vmatpush2.msra.mxu0 0.0
    %138 = vmatprep.subr.mxu0 0.0
    %139 = vmatpush2.msra.mxu0 0.0
    %140 = vmatprep.subr.mxu0 0.0
    %141 = vmatpush2.msra.mxu0 0.0
    %142 = vmatprep.subr.mxu0 0.0
    %143 = vmatpush2.msra.mxu0 0.0
    %144 = vmatprep.subr.mxu0 0.0
    %145 = vmatpush2.msra.mxu0 0.0
    %146 = vmatprep.subr.mxu0 0.0
    %147 = vmatpush2.msra.mxu0 0.0
    %148 = vmatprep.mubr.f32.mxu0 0.0
    %149 = vmatmul.mubr.f32.gmra.mxu0 %v67
    %v150 = vpop.f32.mrf.mxu0
    %v151 = vadd.f32 0.0, %v150
    %v152 = vpop.f32.mrf.mxu0
    %153 = vdwg.mxu0
    %v154 = vld [vmem:[#allocation2] sm:$0xff]
    %v155 = vld [vmem:[#allocation8] sm:$0xff]
    %vm156 = vcmask 64512
    %v158 = vsel %vm156, %v154, 0
    %160 = vmatprep.subr.mxu0 0.0
    %161 = vmatpush1.msra.mxu0 0.0
    %162 = vmatprep.subr.mxu0 0.0
    %163 = vmatpush1.msra.mxu0 0.0
    %164 = vmatprep.subr.mxu0 0.0
    %165 = vmatpush1.msra.mxu0 0.0
    %166 = vmatprep.subr.mxu0 0.0
    %167 = vmatpush1.msra.mxu0 0.0
    %168 = vmatprep.subr.mxu0 0.0
    %169 = vmatpush1.msra.mxu0 0.0
    %170 = vmatprep.subr.mxu0 0.0
    %171 = vmatpush1.msra.mxu0 0.0
    %172 = vmatprep.subr.mxu0 0.0
    %173 = vmatpush1.msra.mxu0 0.0
    %174 = vmatprep.subr.mxu0 0.0
    %175 = vmatpush1.msra.mxu0 0.0
    %176 = vmatprep.subr.mxu0 0.0
    %177 = vmatpush1.msra.mxu0 0.0
    %178 = vmatprep.subr.mxu0 0.0
    %179 = vmatpush1.msra.mxu0 0.0
    %180 = vmatprep.subr.mxu0 0.0
    %181 = vmatpush1.msra.mxu0 0.0
    %182 = vmatprep.subr.mxu0 0.0
    %183 = vmatpush1.msra.mxu0 0.0
    %184 = vmatprep.subr.mxu0 0.0
    %185 = vmatpush1.msra.mxu0 0.0
    %186 = vmatprep.subr.mxu0 0.0
    %187 = vmatpush1.msra.mxu0 0.0
    %188 = vmatprep.subr.mxu0 0.0
    %189 = vmatpush1.msra.mxu0 0.0
    %190 = vmatprep.subr.mxu0 0.0
    %191 = vmatpush1.msra.mxu0 %v155
    %192 = vmatprep.subr.mxu0 0.0
    %193 = vmatpush2.msra.mxu0 0.0
    %194 = vmatprep.subr.mxu0 0.0
    %195 = vmatpush2.msra.mxu0 0.0
    %196 = vmatprep.subr.mxu0 0.0
    %197 = vmatpush2.msra.mxu0 0.0
    %198 = vmatprep.subr.mxu0 0.0
    %199 = vmatpush2.msra.mxu0 0.0
    %200 = vmatprep.subr.mxu0 0.0
    %201 = vmatpush2.msra.mxu0 0.0
    %202 = vmatprep.subr.mxu0 0.0
    %203 = vmatpush2.msra.mxu0 0.0
    %204 = vmatprep.subr.mxu0 0.0
    %205 = vmatpush2.msra.mxu0 0.0
    %206 = vmatprep.subr.mxu0 0.0
    %207 = vmatpush2.msra.mxu0 0.0
    %208 = vmatprep.subr.mxu0 0.0
    %209 = vmatpush2.msra.mxu0 0.0
    %210 = vmatprep.subr.mxu0 0.0
    %211 = vmatpush2.msra.mxu0 0.0
    %212 = vmatprep.subr.mxu0 0.0
    %213 = vmatpush2.msra.mxu0 0.0
    %214 = vmatprep.subr.mxu0 0.0
    %215 = vmatpush2.msra.mxu0 0.0
    %216 = vmatprep.subr.mxu0 0.0
    %217 = vmatpush2.msra.mxu0 0.0
    %218 = vmatprep.subr.mxu0 0.0
    %219 = vmatpush2.msra.mxu0 0.0
    %220 = vmatprep.subr.mxu0 0.0
    %221 = vmatpush2.msra.mxu0 0.0
    %222 = vmatprep.subr.mxu0 0.0
    %223 = vmatpush2.msra.mxu0 0.0
    %224 = vmatprep.mubr.f32.mxu0 0.0
    %225 = vmatmul.mubr.f32.gmra.mxu0 %v158
    %v226 = vpop.f32.mrf.mxu0
    %v227 = vadd.f32 0.0, %v226
    %v228 = vpop.f32.mrf.mxu0
    %229 = vdwg.mxu0
    %v230 = vmul.f32 %v227, %v67
    %v231 = vrcp.pop %v151
    %v232 = vmul.f32 %v230, %v231
    %233 = vst [vmem:[#allocation10] sm:$0xff] %v232
    // Predicated region
    $region34: #{tpu_custom_call.1} parent=1 // pred_check
      _
    $region35: #{tpu_custom_call.1} parent=1 // pred_check_branch
      %235 = sbr.rel (0) target = $region37
    $region36: #{tpu_custom_call.1} parent=1 // pred_region
      %s237 = ssub.s32 128, 128
      %238 = vsyncadd [#allocation4], %s237
      %s240 = sshll.u32 [#allocation10], 4
      %s241 = int_to_ptr.vmem [resolvable:$true] %s240
      %243 = dma.vmem_to_hbm [thread:$0]  %s241, 128, %s4, [#allocation4]
    $region37: #{tpu_custom_call.1} parent=1 // pred_fallthru
      _
    // Predicated region
    $region38: #{tpu_custom_call.1} parent=1 // pred_check
      _
    $region39: #{tpu_custom_call.1} parent=1 // pred_check_branch
      %245 = sbr.rel (0) target = $region41
    $region40: #{tpu_custom_call.1} parent=1 // pred_region
      %246 = dma.done [#allocation4], 128
    $region41: #{tpu_custom_call.1} parent=1 // pred_fallthru
      _
    %247 = vsyncpa [#allocation3], 1
    %248 = vsyncpa [#allocation6], 1
    %249 = vsyncpa [#allocation9], 1
    %250 = vsyncpa [#allocation4], 1

</llo_original>
